<compile_context>
chip_gen: v7x
topology: tpu7x:2x2x1
jax: 0.10.0
libtpu: 0.0.40
codegen_flags: <defaults>
</compile_context>

<pallas_src>
import functools

import jax
import jax.numpy as jnp
from jax import lax
from jax.experimental import pallas as pl
from jax.experimental.pallas import tpu as pltpu


def _pow_static(x, p):
    """x ** p for a static python float p, avoiding EUP exp/log when p is (half-)integer."""
    p = float(p)
    ip = int(p)
    if p == ip and 1 <= ip <= 8:                      # integer p -> multiply chain
        r = x
        for _ in range(ip - 1):
            r = r * x
        return r
    if p > 0 and (2.0 * p) == int(2.0 * p) and ip <= 8:   # half-integer p (e.g. 2.5)
        r = jnp.sqrt(x)                                # NaN for x<0, matching torch.pow
        for _ in range(ip):
            r = r * x
        return r
    return jnp.exp(p * jnp.log(x))                     # generic fallback


def _rgem_kernel(xpad_ref, x_ref, o_ref, *, pr, size, h, w, inv_nom):
    # xpad_ref: (1, CT, H+2p, W+2p)   x_ref / o_ref: (1, CT, H, W)
    xpad = xpad_ref[...].astype(jnp.float32) * inv_nom   # x / nominater
    xpow = _pow_static(xpad, pr)                          # (x/nom) ** pr

    # Separable (size x size) window sum, stride 1, via static shifted adds.
    tmp = xpow[:, :, :, 0:w]
    for d in range(1, size):
        tmp = tmp + xpow[:, :, :, d:d + w]                # sum along W
    acc = tmp[:, :, 0:h, :]
    for d in range(1, size):
        acc = acc + tmp[:, :, d:d + h, :]                 # sum along H

    lp = jnp.exp((1.0 / pr) * jnp.log(acc))               # acc ** (1/pr); acc >= 0 (or NaN)
    x = x_ref[...].astype(jnp.float32)
    o_ref[...] = (0.5 * lp + 0.5 * x).astype(o_ref.dtype)


def _pick_c_tile(c, plane_bytes, target_bytes=1 << 20):
    """Largest divisor of c whose f32 padded block stays around `target_bytes`."""
    max_tile = max(1, target_bytes // max(plane_bytes, 1))
    t = int(min(c, max_tile))
    while c % t != 0:
        t -= 1
    return t


def rgem_forward(x, pr=2.5, size=5):
    """rgem forward: 0.5 * LPPool2d(pr,size,stride=1)(ReflectionPad2d(p)(x/nom)) + 0.5 * x."""
    assert x.ndim == 4, "expected NCHW input"
    assert size % 2 == 1, "stride-1 LP pool only preserves shape for odd size"
    n, c, h, w = x.shape
    pad = int((size - 1) // 2)
    assert h > pad and w > pad, "reflection pad requires spatial dims > pad"

    nominater = float((size ** 2) ** (1.0 / pr))
    hp, wp = h + 2 * pad, w + 2 * pad

    # Reflection padding (layout plumbing) in the wrapper; scaling stays in-kernel.
    x_pad = jnp.pad(x, ((0, 0), (0, 0), (pad, pad), (pad, pad)), mode="reflect")

    # Channel tile keeps the per-step padded f32 block ~1 MiB (bounded VMEM on
    # v5e/v6e/v7x with double-buffered inputs + outputs well under the scoped limit).
    # TODO(synk): spatial (halo) tiling for single channel planes that exceed VMEM.
    c_tile = _pick_c_tile(c, hp * wp * 4)

    kernel = functools.partial(
        _rgem_kernel, pr=float(pr), size=int(size), h=h, w=w,
        inv_nom=1.0 / nominater)

    return pl.pallas_call(
        kernel,
        out_shape=jax.ShapeDtypeStruct((n, c, h, w), x.dtype),
        grid=(n, c // c_tile),
        in_specs=[
            pl.BlockSpec((1, c_tile, hp, wp), lambda i, j: (i, j, 0, 0)),
            pl.BlockSpec((1, c_tile, h, w), lambda i, j: (i, j, 0, 0)),
        ],
        out_specs=pl.BlockSpec((1, c_tile, h, w), lambda i, j: (i, j, 0, 0)),
        compiler_params=pltpu.CompilerParams(
            dimension_semantics=("parallel", "parallel"),
            vmem_limit_bytes=32 * 1024 * 1024),
    )(x_pad, x)


def _reference(x, pr=2.5, size=5):
    """Pure-JAX reference mirroring the PyTorch module."""
    pad = int((size - 1) // 2)
    nom = (size ** 2) ** (1.0 / pr)
    xs = x.astype(jnp.float32) / nom
    xs = jnp.pad(xs, ((0, 0), (0, 0), (pad, pad), (pad, pad)), mode="reflect")
    pooled = lax.reduce_window(xs ** pr, jnp.float32(0.0), lax.add,
                               (1, 1, size, size), (1, 1, 1, 1), "VALID")
    lp = pooled ** (1.0 / pr)
    return (0.5 * lp + 0.5 * x.astype(jnp.float32)).astype(x.dtype)


if __name__ == "__main__":
    key = jax.random.PRNGKey(0)
    # Small NCHW feature map. Values are non-negative: rgem is applied to post-ReLU
    # features, and x**2.5 on negatives is NaN in both torch and jax.
    x = jax.random.uniform(key, (2, 4, 16, 16), dtype=jnp.float32)

    out = rgem_forward(x, pr=2.5, size=5)
    out = jax.block_until_ready(out)

    ref = _reference(x, pr=2.5, size=5)
    assert out.shape == x.shape, out.shape
    assert jnp.allclose(out, ref, rtol=1e-4, atol=1e-4), float(jnp.max(jnp.abs(out - ref)))

    print("KERNEL_OK")
</pallas_src>

<mosaic_0001>
module attributes {stable_mosaic.version = 11 : i64} {
  func.func @_rgem_kernel(%arg0: i32, %arg1: i32, %arg2: memref<1x4x20x20xf32, #tpu.memory_space<vmem>>, %arg3: memref<1x4x16x16xf32, #tpu.memory_space<vmem>>, %arg4: memref<1x4x16x16xf32, #tpu.memory_space<vmem>>) attributes {dimension_semantics = [#tpu.dimension_semantics<parallel>, #tpu.dimension_semantics<parallel>], iteration_bounds = array<i64: 2, 1>, scalar_prefetch = 0 : i64, scratch_operands = 0 : i64, tpu.core_type = #tpu.core_type<tc>, window_params = [{transform_indices = @transform_0, window_bounds = array<i64: 1, 4, 20, 20>}, {transform_indices = @transform_1, window_bounds = array<i64: 1, 4, 16, 16>}, {transform_indices = @transform_2, window_bounds = array<i64: 1, 4, 16, 16>}]} {
    %c0 = arith.constant 0 : index
    %c0_0 = arith.constant 0 : index
    %c0_1 = arith.constant 0 : index
    %c0_2 = arith.constant 0 : index
    %0 = vector.load %arg2[%c0, %c0_0, %c0_1, %c0_2] : memref<1x4x20x20xf32, #tpu.memory_space<vmem>>, vector<1x4x20x20xf32>
    %cst = arith.constant 0.275945932 : f32
    %1 = vector.broadcast %cst : f32 to vector<1x4x20x20xf32>
    %2 = arith.mulf %0, %1 : vector<1x4x20x20xf32>
    %3 = math.sqrt %2 : vector<1x4x20x20xf32>
    %4 = arith.mulf %3, %2 : vector<1x4x20x20xf32>
    %5 = arith.mulf %4, %2 : vector<1x4x20x20xf32>
    %6 = vector.extract_strided_slice %5 {offsets = [0, 0, 0, 0], sizes = [1, 4, 20, 16], strides = [1, 1, 1, 1]} : vector<1x4x20x20xf32> to vector<1x4x20x16xf32>
    %7 = vector.extract_strided_slice %5 {offsets = [0, 0, 0, 1], sizes = [1, 4, 20, 16], strides = [1, 1, 1, 1]} : vector<1x4x20x20xf32> to vector<1x4x20x16xf32>
    %8 = arith.addf %6, %7 : vector<1x4x20x16xf32>
    %9 = vector.extract_strided_slice %5 {offsets = [0, 0, 0, 2], sizes = [1, 4, 20, 16], strides = [1, 1, 1, 1]} : vector<1x4x20x20xf32> to vector<1x4x20x16xf32>
    %10 = arith.addf %8, %9 : vector<1x4x20x16xf32>
    %11 = vector.extract_strided_slice %5 {offsets = [0, 0, 0, 3], sizes = [1, 4, 20, 16], strides = [1, 1, 1, 1]} : vector<1x4x20x20xf32> to vector<1x4x20x16xf32>
    %12 = arith.addf %10, %11 : vector<1x4x20x16xf32>
    %13 = vector.extract_strided_slice %5 {offsets = [0, 0, 0, 4], sizes = [1, 4, 20, 16], strides = [1, 1, 1, 1]} : vector<1x4x20x20xf32> to vector<1x4x20x16xf32>
    %14 = arith.addf %12, %13 : vector<1x4x20x16xf32>
    %15 = vector.extract_strided_slice %14 {offsets = [0, 0, 0, 0], sizes = [1, 4, 16, 16], strides = [1, 1, 1, 1]} : vector<1x4x20x16xf32> to vector<1x4x16x16xf32>
    %16 = vector.extract_strided_slice %14 {offsets = [0, 0, 1, 0], sizes = [1, 4, 16, 16], strides = [1, 1, 1, 1]} : vector<1x4x20x16xf32> to vector<1x4x16x16xf32>
    %17 = arith.addf %15, %16 : vector<1x4x16x16xf32>
    %18 = vector.extract_strided_slice %14 {offsets = [0, 0, 2, 0], sizes = [1, 4, 16, 16], strides = [1, 1, 1, 1]} : vector<1x4x20x16xf32> to vector<1x4x16x16xf32>
    %19 = arith.addf %17, %18 : vector<1x4x16x16xf32>
    %20 = vector.extract_strided_slice %14 {offsets = [0, 0, 3, 0], sizes = [1, 4, 16, 16], strides = [1, 1, 1, 1]} : vector<1x4x20x16xf32> to vector<1x4x16x16xf32>
    %21 = arith.addf %19, %20 : vector<1x4x16x16xf32>
    %22 = vector.extract_strided_slice %14 {offsets = [0, 0, 4, 0], sizes = [1, 4, 16, 16], strides = [1, 1, 1, 1]} : vector<1x4x20x16xf32> to vector<1x4x16x16xf32>
    %23 = arith.addf %21, %22 : vector<1x4x16x16xf32>
    %24 = math.log %23 : vector<1x4x16x16xf32>
    %cst_3 = arith.constant 4.000000e-01 : f32
    %25 = vector.broadcast %cst_3 : f32 to vector<1x4x16x16xf32>
    %26 = arith.mulf %25, %24 : vector<1x4x16x16xf32>
    %27 = math.exp %26 : vector<1x4x16x16xf32>
    %c0_4 = arith.constant 0 : index
    %c0_5 = arith.constant 0 : index
    %c0_6 = arith.constant 0 : index
    %c0_7 = arith.constant 0 : index
    %28 = vector.load %arg3[%c0_4, %c0_5, %c0_6, %c0_7] : memref<1x4x16x16xf32, #tpu.memory_space<vmem>>, vector<1x4x16x16xf32>
    %cst_8 = arith.constant 5.000000e-01 : f32
    %29 = vector.broadcast %cst_8 : f32 to vector<1x4x16x16xf32>
    %30 = arith.mulf %29, %27 : vector<1x4x16x16xf32>
    %cst_9 = arith.constant 5.000000e-01 : f32
    %31 = vector.broadcast %cst_9 : f32 to vector<1x4x16x16xf32>
    %32 = arith.mulf %31, %28 : vector<1x4x16x16xf32>
    %33 = arith.addf %30, %32 : vector<1x4x16x16xf32>
    %c0_10 = arith.constant 0 : index
    %c0_11 = arith.constant 0 : index
    %c0_12 = arith.constant 0 : index
    %c0_13 = arith.constant 0 : index
    %34 = vector.load %arg4[%c0_10, %c0_11, %c0_12, %c0_13] : memref<1x4x16x16xf32, #tpu.memory_space<vmem>>, vector<1x4x16x16xf32>
    tpu.vector_store %arg4[%c0_10, %c0_11, %c0_12, %c0_13], %33 {strides = array<i32>} : memref<1x4x16x16xf32, #tpu.memory_space<vmem>>, vector<1x4x16x16xf32>,
    return
  }
  func.func @transform_0(%arg0: i32, %arg1: i32) -> (i32, i32, i32, i32) {
    %c0_i32 = arith.constant 0 : i32
    %c0_i32_0 = arith.constant 0 : i32
    %c0_i32_1 = arith.constant 0 : i32
    return %arg0, %arg1, %c0_i32, %c0_i32_0 : i32, i32, i32, i32
  }
  func.func @transform_1(%arg0: i32, %arg1: i32) -> (i32, i32, i32, i32) {
    %c0_i32 = arith.constant 0 : i32
    %c0_i32_0 = arith.constant 0 : i32
    %c0_i32_1 = arith.constant 0 : i32
    return %arg0, %arg1, %c0_i32, %c0_i32_0 : i32, i32, i32, i32
  }
  func.func @transform_2(%arg0: i32, %arg1: i32) -> (i32, i32, i32, i32) {
    %c0_i32 = arith.constant 0 : i32
    %c0_i32_0 = arith.constant 0 : i32
    %c0_i32_1 = arith.constant 0 : i32
    return %arg0, %arg1, %c0_i32, %c0_i32_0 : i32, i32, i32, i32
  }
}

</mosaic_0001>

<llo_original>
// kernel: tpu_custom_call.1
$region0: #{tpu_custom_call.1}
  #allocation0 [shape = 'u32[]', space=smem, size = 0x4, offset = 0x4, fixed_abs, tag = 'smem constant byte address 0x4 - core index']
  #allocation1 [shape = 'u32[144,128]{1,0:T(1,128)}', space=vmem, size = 0x12000, scoped, tag = 'internal scratch']
  %s0 = inlined_call_operand.vmem [shape: f32[2,4,20,20], index: 0, kind: input, shape index: {}]
  %s1 = inlined_call_operand.vmem [shape: f32[2,4,16,16], index: 1, kind: input, shape index: {}]
  %s2 = inlined_call_operand.hbm [shape: f32[2,4,16,16], index: 2, kind: output, shape index: {}]
  %s3 = sld [smem:[#allocation0]]
  $region41: #{tpu_custom_call.1} parent=0
    _
  %s5 = ssub.s32 1, %s3
  %s6 = scalar_select 0, %s5, %s3
  $region1: #{tpu_custom_call.1} parent=0
    #allocation2 [shape = 'u8[65536]{0}', space=vmem, size = 0x10000, scoped, tag = 'output window, operand 0']
    #allocation3 [shape = 's32[2]{0}', space=sflag, size = 0x8, scoped, tag = 'scoped memory for tpu_custom_call.1']
    %7 = vsyncpa [#allocation3], 0
    %s8 = scalar_lea.sflag [#allocation3], 1
    %9 = vsyncpa %s8, 0
    loop: start=0, step=1, limit=4
    $region2: #{tpu_custom_call.1} parent=1 // loop_pre_header
      _
    $region3: #{tpu_custom_call.1} parent=1 // loop_header
      %s11 = sphi 0, %s15
      %p12 = scmp.ge.s32.totalorder %s11, 4
      %s18 = sphi 0, %s30
      %s19 = sphi 0, %s26
      %s20 = sphi 0, %s18
      %s21 = sphi 0, %s19
      %s22 = sphi 0, %s20
      %s23 = sphi 0, %s21
      %s35 = sphi 0, %s37
      %s38 = sphi 0, %s35
      %s39 = sphi 0, %s38
      %s55 = sphi 0, %s39
      %s63 = sphi 0, %s65
      %s66 = sphi 0, %s63
      %s67 = sphi 0, %s66
      %s83 = sphi 0, %s67
      %s91 = sphi 0, %s93
      %s94 = sphi 0, %s91
      %s95 = sphi 0, %s94
      %s111 = sphi 0, %s95
    $region4: #{tpu_custom_call.1} parent=1 // loop_header_branch
      %14 = sbr.rel (%p12) target = $region8
    $region5: #{tpu_custom_call.1} parent=1 // loop_body
      %s16 = ssub.s32 %s11, 1
      %s17 = ssub.s32 %s11, 2
      %s24 = sadd.s32 1, %s19
      %p25 = scmp.ge.s32.totalorder %s24, 1
      %s26 = scalar_select %p25, 0, %s24
      %s27 = sadd.s32 1, %s18
      %s28 = scalar_select %p25, %s27, %s18
      %p29 = scmp.ge.s32.totalorder %s28, 2
      %s30 = scalar_select %p29, 0, %s28
      %s31 = ssub.s32 %s18, %s30
      %s32 = ssub.s32 %s19, %s26
      %s33 = sor.u32 %s31, %s32
      %p34 = scmp.eq.s32.totalorder %s33, 0
      %s36 = sadd.s32 %s35, 1
      %s37 = scalar_select %p34, %s35, %s36
      %p40 = pneg %p34
      %p41 = scmp.eq.s32.totalorder %s11, 1
      %p42 = por %p40, %p41
      %p43 = scmp.ne.s32.totalorder %s35, %s38
      %p44 = scmp.eq.s32.totalorder %s11, 0
      %p45 = por %p43, %p44
      %p46 = scmp.ne.s32.totalorder %s35, %s38
      %p47 = scmp.eq.s32.totalorder %s16, 1
      %p48 = por %p46, %p47
      %p49 = scmp.ne.s32.totalorder %s38, %s39
      %p50 = scmp.eq.s32.totalorder %s16, 0
      %p51 = por %p49, %p50
      %p52 = scmp.ne.s32.totalorder %s38, %s39
      %p53 = scmp.eq.s32.totalorder %s17, 1
      %p54 = por %p52, %p53
      %p56 = scmp.ne.s32.totalorder %s39, %s55
      %p57 = scmp.eq.s32.totalorder %s17, 0
      %p58 = por %p56, %p57
      %s59 = ssub.s32 %s18, %s30
      %s60 = ssub.s32 %s19, %s26
      %s61 = sor.u32 %s59, %s60
      %p62 = scmp.eq.s32.totalorder %s61, 0
      %s64 = sadd.s32 %s63, 1
      %s65 = scalar_select %p62, %s63, %s64
      %p68 = pneg %p62
      %p69 = scmp.eq.s32.totalorder %s11, 1
      %p70 = por %p68, %p69
      %p71 = scmp.ne.s32.totalorder %s63, %s66
      %p72 = scmp.eq.s32.totalorder %s11, 0
      %p73 = por %p71, %p72
      %p74 = scmp.ne.s32.totalorder %s63, %s66
      %p75 = scmp.eq.s32.totalorder %s16, 1
      %p76 = por %p74, %p75
      %p77 = scmp.ne.s32.totalorder %s66, %s67
      %p78 = scmp.eq.s32.totalorder %s16, 0
      %p79 = por %p77, %p78
      %p80 = scmp.ne.s32.totalorder %s66, %s67
      %p81 = scmp.eq.s32.totalorder %s17, 1
      %p82 = por %p80, %p81
      %p84 = scmp.ne.s32.totalorder %s67, %s83
      %p85 = scmp.eq.s32.totalorder %s17, 0
      %p86 = por %p84, %p85
      %s87 = ssub.s32 %s18, %s30
      %s88 = ssub.s32 %s19, %s26
      %s89 = sor.u32 %s87, %s88
      %p90 = scmp.eq.s32.totalorder %s89, 0
      %s92 = sadd.s32 %s91, 1
      %s93 = scalar_select %p90, %s91, %s92
      %p96 = pneg %p90
      %p97 = scmp.eq.s32.totalorder %s11, 1
      %p98 = por %p96, %p97
      %p99 = scmp.ne.s32.totalorder %s91, %s94
      %p100 = scmp.eq.s32.totalorder %s11, 0
      %p101 = por %p99, %p100
      %p102 = scmp.ne.s32.totalorder %s91, %s94
      %p103 = scmp.eq.s32.totalorder %s16, 1
      %p104 = por %p102, %p103
      %p105 = scmp.ne.s32.totalorder %s94, %s95
      %p106 = scmp.eq.s32.totalorder %s16, 0
      %p107 = por %p105, %p106
      %p108 = scmp.ne.s32.totalorder %s94, %s95
      %p109 = scmp.eq.s32.totalorder %s17, 1
      %p110 = por %p108, %p109
      %p112 = scmp.ne.s32.totalorder %s95, %s111
      %p113 = scmp.eq.s32.totalorder %s17, 0
      %p114 = por %p112, %p113
      %p115 = scmp.le.s32.totalorder 1, %s11
      %p116 = scmp.lt.s32.totalorder %s11, 3
      %p117 = pnand %p115, %p116
      %p118 = pneg %p117
      // Predicated region
      $region9: #{tpu_custom_call.1} parent=5 // pred_check
        _
      $region10: #{tpu_custom_call.1} parent=5 // pred_check_branch
        %120 = sbr.rel (%p117) target = $region12
      $region11: #{tpu_custom_call.1} parent=5 // pred_region
        %s121 = ssub.s32 %s11, 1
      $region12: #{tpu_custom_call.1} parent=5 // pred_fallthru
        _
      %p122 = scmp.lt.s32.totalorder %s11, 2
      // Predicated region
      $region13: #{tpu_custom_call.1} parent=5 // pred_check
        %p123 = pneg %p122
      $region14: #{tpu_custom_call.1} parent=5 // pred_check_branch
        %125 = sbr.rel (%p123) target = $region16
      $region15: #{tpu_custom_call.1} parent=5 // pred_region
        // Predicated region
        $region17: #{tpu_custom_call.1} parent=15 // pred_check
          %p126 = pneg %p45
        $region18: #{tpu_custom_call.1} parent=15 // pred_check_branch
          %128 = sbr.rel (%p126) target = $region20
        $region19: #{tpu_custom_call.1} parent=15 // pred_region
          %s129 = smul.u32 4, %s19
          %p130 = scmp.lt.s32.totalorder %s18, 1
          %s131 = scalar_select %p130, %s18, 1
          %p132 = scmp.lt.s32.totalorder %s129, 3
          %s133 = scalar_select %p132, %s129, 3
          %s134 = smul.addr %s133, 3
          %s135 = smul.addr %s131, 12
          %s136 = sadd.s32 %s134, %s135
          %s137 = smul.addr %s136, 8
          %s138 = scalar_lea.vmem %s0, %s137
          %s139 = smul.u32 4, %s19
        $region20: #{tpu_custom_call.1} parent=15 // pred_fallthru
          _
        // Predicated region
        $region21: #{tpu_custom_call.1} parent=15 // pred_check
          %p140 = pneg %p73
        $region22: #{tpu_custom_call.1} parent=15 // pred_check_branch
          %142 = sbr.rel (%p140) target = $region24
        $region23: #{tpu_custom_call.1} parent=15 // pred_region
          %s143 = smul.u32 4, %s19
          %p144 = scmp.lt.s32.totalorder %s18, 1
          %s145 = scalar_select %p144, %s18, 1
          %p146 = scmp.lt.s32.totalorder %s143, 3
          %s147 = scalar_select %p146, %s143, 3
          %s148 = smul.addr %s147, 2
          %s149 = smul.addr %s145, 8
          %s150 = sadd.s32 %s148, %s149
          %s151 = smul.addr %s150, 8
          %s152 = scalar_lea.vmem %s1, %s151
          %s153 = smul.u32 4, %s19
        $region24: #{tpu_custom_call.1} parent=15 // pred_fallthru
          _
      $region16: #{tpu_custom_call.1} parent=5 // pred_fallthru
        _
      %p154 = scmp.le.s32.totalorder 1, %s11
      %p155 = scmp.lt.s32.totalorder %s11, 3
      %p156 = pnand %p154, %p155
      %p157 = pneg %p156
      // Predicated region
      $region25: #{tpu_custom_call.1} parent=5 // pred_check
        _
      $region26: #{tpu_custom_call.1} parent=5 // pred_check_branch
        %159 = sbr.rel (%p156) target = $region28
      $region27: #{tpu_custom_call.1} parent=5 // pred_region
        %s160 = ssub.s32 %s11, 1
        %s161 = smul.u32 4, %s21
        %p162 = scmp.lt.s32.totalorder %s20, 1
        %s163 = scalar_select %p162, %s20, 1
        %p164 = scmp.lt.s32.totalorder %s161, 3
        %s165 = scalar_select %p164, %s161, 3
        %s166 = smul.addr %s165, 3
        %s167 = smul.addr %s163, 12
        %s168 = sadd.s32 %s166, %s167
        %s169 = smul.addr %s168, 8
        %s170 = scalar_lea.vmem %s0, %s169
        %p171 = pneg %p51
        %p172 = pneg %p48
        %s173 = smul.u32 4, %s21
        %p174 = scmp.lt.s32.totalorder %s20, 1
        %s175 = scalar_select %p174, %s20, 1
        %p176 = scmp.lt.s32.totalorder %s173, 3
        %s177 = scalar_select %p176, %s173, 3
        %s178 = smul.addr %s177, 2
        %s179 = smul.addr %s175, 8
        %s180 = sadd.s32 %s178, %s179
        %s181 = smul.addr %s180, 8
        %s182 = scalar_lea.vmem %s1, %s181
        %p183 = pneg %p79
        %p184 = pneg %p76
        %p185 = pneg %p107
        %p186 = pneg %p104
        %s187 = sand.u32 %s94, 1
        %s188 = scalar_lea.sflag [#allocation3], %s187
        %s189 = sand.u32 %s94, 1
        %s190 = smul.addr %s189, 64
        %s191 = scalar_lea.vmem [#allocation2], %s190
        %s192 = smul.u32 4, %s21
        %p193 = scmp.lt.s32.totalorder %s20, 1
        %s194 = scalar_select %p193, %s20, 1
        %p195 = scmp.lt.s32.totalorder %s192, 3
        %s196 = scalar_select %p195, %s192, 3
        %s197 = smul.addr %s196, 3
        %s198 = smul.addr %s194, 12
        %s199 = sadd.s32 %s197, %s198
        %s200 = smul.addr %s199, 8
        %s201 = scalar_lea.vmem %s0, %s200
        %s202 = smul.u32 4, %s21
        %s203 = smul.u32 4, %s21
        %p204 = scmp.lt.s32.totalorder %s20, 1
        %s205 = scalar_select %p204, %s20, 1
        %p206 = scmp.lt.s32.totalorder %s203, 3
        %s207 = scalar_select %p206, %s203, 3
        %s208 = smul.addr %s207, 2
        %s209 = smul.addr %s205, 8
        %s210 = sadd.s32 %s208, %s209
        %s211 = smul.addr %s210, 8
        %s212 = scalar_lea.vmem %s1, %s211
        %s213 = smul.u32 4, %s21
        %s214 = smul.u32 4, %s21
        %v215 = vld [vmem:[%s201] sm:$0xff]
        %v216 = vld [vmem:[%s201 + $0x8] sm:$0xff]
        %v217 = vld [vmem:[%s201 + $0x10] sm:$0xf]
        %v218 = vld [vmem:[%s201 + $0x18] sm:$0xff]
        %v219 = vld [vmem:[%s201 + $0x20] sm:$0xff]
        %v220 = vld [vmem:[%s201 + $0x28] sm:$0xf]
        %v221 = vld [vmem:[%s201 + $0x30] sm:$0xff]
        %v222 = vld [vmem:[%s201 + $0x38] sm:$0xff]
        %v223 = vld [vmem:[%s201 + $0x40] sm:$0xf]
        %v224 = vld [vmem:[%s201 + $0x48] sm:$0xff]
        %v225 = vld [vmem:[%s201 + $0x50] sm:$0xff]
        %v226 = vld [vmem:[%s201 + $0x58] sm:$0xf]
        %v227 = vmul.f32 %v215, 0.27594593
        %v228 = vmul.f32 %v216, 0.27594593
        %v229 = vmul.f32 %v217, 0.27594593
        %v230 = vmul.f32 %v218, 0.27594593
        %v231 = vmul.f32 %v219, 0.27594593
        %v232 = vmul.f32 %v220, 0.27594593
        %v233 = vmul.f32 %v221, 0.27594593
        %v234 = vmul.f32 %v222, 0.27594593
        %v235 = vmul.f32 %v223, 0.27594593
        %v236 = vmul.f32 %v224, 0.27594593
        %v237 = vmul.f32 %v225, 0.27594593
        %v238 = vmul.f32 %v226, 0.27594593
        %v239 = vrsqrt.pop %v227
        %v240 = vmul.f32 %v227, %v239
        %vm241 = vcmp.eq.f32.partialorder %v227, inf
        %v242 = vsel %vm241, %v227, %v240
        %vm243 = vcmp.eq.f32.partialorder %v227, 0.0
        %v244 = vand.u32 %v227, 2147483648
        %v245 = vsel %vm243, %v244, %v242
        %v246 = vrsqrt.pop %v228
        %v247 = vmul.f32 %v228, %v246
        %vm248 = vcmp.eq.f32.partialorder %v228, inf
        %v249 = vsel %vm248, %v228, %v247
        %vm250 = vcmp.eq.f32.partialorder %v228, 0.0
        %v251 = vand.u32 %v228, 2147483648
        %v252 = vsel %vm250, %v251, %v249
        %v253 = vrsqrt.pop %v229
        %v254 = vmul.f32 %v229, %v253
        %vm255 = vcmp.eq.f32.partialorder %v229, inf
        %v256 = vsel %vm255, %v229, %v254
        %vm257 = vcmp.eq.f32.partialorder %v229, 0.0
        %v258 = vand.u32 %v229, 2147483648
        %v259 = vsel %vm257, %v258, %v256
        %v260 = vrsqrt.pop %v230
        %v261 = vmul.f32 %v230, %v260
        %vm262 = vcmp.eq.f32.partialorder %v230, inf
        %v263 = vsel %vm262, %v230, %v261
        %vm264 = vcmp.eq.f32.partialorder %v230, 0.0
        %v265 = vand.u32 %v230, 2147483648
        %v266 = vsel %vm264, %v265, %v263
        %v267 = vrsqrt.pop %v231
        %v268 = vmul.f32 %v231, %v267
        %vm269 = vcmp.eq.f32.partialorder %v231, inf
        %v270 = vsel %vm269, %v231, %v268
        %vm271 = vcmp.eq.f32.partialorder %v231, 0.0
        %v272 = vand.u32 %v231, 2147483648
        %v273 = vsel %vm271, %v272, %v270
        %v274 = vrsqrt.pop %v232
        %v275 = vmul.f32 %v232, %v274
        %vm276 = vcmp.eq.f32.partialorder %v232, inf
        %v277 = vsel %vm276, %v232, %v275
        %vm278 = vcmp.eq.f32.partialorder %v232, 0.0
        %v279 = vand.u32 %v232, 2147483648
        %v280 = vsel %vm278, %v279, %v277
        %v281 = vrsqrt.pop %v233
        %v282 = vmul.f32 %v233, %v281
        %vm283 = vcmp.eq.f32.partialorder %v233, inf
        %v284 = vsel %vm283, %v233, %v282
        %vm285 = vcmp.eq.f32.partialorder %v233, 0.0
        %v286 = vand.u32 %v233, 2147483648
        %v287 = vsel %vm285, %v286, %v284
        %v288 = vrsqrt.pop %v234
        %v289 = vmul.f32 %v234, %v288
        %vm290 = vcmp.eq.f32.partialorder %v234, inf
        %v291 = vsel %vm290, %v234, %v289
        %vm292 = vcmp.eq.f32.partialorder %v234, 0.0
        %v293 = vand.u32 %v234, 2147483648
        %v294 = vsel %vm292, %v293, %v291
        %v295 = vrsqrt.pop %v235
        %v296 = vmul.f32 %v235, %v295
        %vm297 = vcmp.eq.f32.partialorder %v235, inf
        %v298 = vsel %vm297, %v235, %v296
        %vm299 = vcmp.eq.f32.partialorder %v235, 0.0
        %v300 = vand.u32 %v235, 2147483648
        %v301 = vsel %vm299, %v300, %v298
        %v302 = vrsqrt.pop %v236
        %v303 = vmul.f32 %v236, %v302
        %vm304 = vcmp.eq.f32.partialorder %v236, inf
        %v305 = vsel %vm304, %v236, %v303
        %vm306 = vcmp.eq.f32.partialorder %v236, 0.0
        %v307 = vand.u32 %v236, 2147483648
        %v308 = vsel %vm306, %v307, %v305
        %v309 = vrsqrt.pop %v237
        %v310 = vmul.f32 %v237, %v309
        %vm311 = vcmp.eq.f32.partialorder %v237, inf
        %v312 = vsel %vm311, %v237, %v310
        %vm313 = vcmp.eq.f32.partialorder %v237, 0.0
        %v314 = vand.u32 %v237, 2147483648
        %v315 = vsel %vm313, %v314, %v312
        %v316 = vrsqrt.pop %v238
        %v317 = vmul.f32 %v238, %v316
        %vm318 = vcmp.eq.f32.partialorder %v238, inf
        %v319 = vsel %vm318, %v238, %v317
        %vm320 = vcmp.eq.f32.partialorder %v238, 0.0
        %v321 = vand.u32 %v238, 2147483648
        %v322 = vsel %vm320, %v321, %v319
        %v323 = vmul.f32 %v245, %v227
        %v324 = vmul.f32 %v252, %v228
        %v325 = vmul.f32 %v259, %v229
        %v326 = vmul.f32 %v266, %v230
        %v327 = vmul.f32 %v273, %v231
        %v328 = vmul.f32 %v280, %v232
        %v329 = vmul.f32 %v287, %v233
        %v330 = vmul.f32 %v294, %v234
        %v331 = vmul.f32 %v301, %v235
        %v332 = vmul.f32 %v308, %v236
        %v333 = vmul.f32 %v315, %v237
        %v334 = vmul.f32 %v322, %v238
        %v335 = vmul.f32 %v323, %v227
        %v336 = vmul.f32 %v324, %v228
        %v337 = vmul.f32 %v325, %v229
        %v338 = vmul.f32 %v326, %v230
        %v339 = vmul.f32 %v327, %v231
        %v340 = vmul.f32 %v328, %v232
        %v341 = vmul.f32 %v329, %v233
        %v342 = vmul.f32 %v330, %v234
        %v343 = vmul.f32 %v331, %v235
        %v344 = vmul.f32 %v332, %v236
        %v345 = vmul.f32 %v333, %v237
        %v346 = vmul.f32 %v334, %v238
        %359 = vrot.lane.b32.xlu0 %v335, 127
        %v360 = vpop.permute.xlu0 %359
        %361 = vrot.lane.b32.xlu0 %v336, 127
        %v362 = vpop.permute.xlu0 %361
        %363 = vrot.lane.b32.xlu0 %v337, 127
        %v364 = vpop.permute.xlu0 %363
        %365 = vrot.lane.b32.xlu0 %v338, 127
        %v366 = vpop.permute.xlu0 %365
        %367 = vrot.lane.b32.xlu0 %v339, 127
        %v368 = vpop.permute.xlu0 %367
        %369 = vrot.lane.b32.xlu0 %v340, 127
        %v370 = vpop.permute.xlu0 %369
        %371 = vrot.lane.b32.xlu0 %v341, 127
        %v372 = vpop.permute.xlu0 %371
        %373 = vrot.lane.b32.xlu0 %v342, 127
        %v374 = vpop.permute.xlu0 %373
        %375 = vrot.lane.b32.xlu0 %v343, 127
        %v376 = vpop.permute.xlu0 %375
        %377 = vrot.lane.b32.xlu0 %v344, 127
        %v378 = vpop.permute.xlu0 %377
        %379 = vrot.lane.b32.xlu0 %v345, 127
        %v380 = vpop.permute.xlu0 %379
        %381 = vrot.lane.b32.xlu0 %v346, 127
        %v382 = vpop.permute.xlu0 %381
        %v395 = vadd.f32 %v335, %v360
        %v396 = vadd.f32 %v336, %v362
        %v397 = vadd.f32 %v337, %v364
        %v398 = vadd.f32 %v338, %v366
        %v399 = vadd.f32 %v339, %v368
        %v400 = vadd.f32 %v340, %v370
        %v401 = vadd.f32 %v341, %v372
        %v402 = vadd.f32 %v342, %v374
        %v403 = vadd.f32 %v343, %v376
        %v404 = vadd.f32 %v344, %v378
        %v405 = vadd.f32 %v345, %v380
        %v406 = vadd.f32 %v346, %v382
        %407 = vrot.lane.b32.xlu0 %v335, 126
        %v408 = vpop.permute.xlu0 %407
        %409 = vrot.lane.b32.xlu0 %v336, 126
        %v410 = vpop.permute.xlu0 %409
        %411 = vrot.lane.b32.xlu0 %v337, 126
        %v412 = vpop.permute.xlu0 %411
        %413 = vrot.lane.b32.xlu0 %v338, 126
        %v414 = vpop.permute.xlu0 %413
        %415 = vrot.lane.b32.xlu0 %v339, 126
        %v416 = vpop.permute.xlu0 %415
        %417 = vrot.lane.b32.xlu0 %v340, 126
        %v418 = vpop.permute.xlu0 %417
        %419 = vrot.lane.b32.xlu0 %v341, 126
        %v420 = vpop.permute.xlu0 %419
        %421 = vrot.lane.b32.xlu0 %v342, 126
        %v422 = vpop.permute.xlu0 %421
        %423 = vrot.lane.b32.xlu0 %v343, 126
        %v424 = vpop.permute.xlu0 %423
        %425 = vrot.lane.b32.xlu0 %v344, 126
        %v426 = vpop.permute.xlu0 %425
        %427 = vrot.lane.b32.xlu0 %v345, 126
        %v428 = vpop.permute.xlu0 %427
        %429 = vrot.lane.b32.xlu0 %v346, 126
        %v430 = vpop.permute.xlu0 %429
        %v443 = vadd.f32 %v395, %v408
        %v444 = vadd.f32 %v396, %v410
        %v445 = vadd.f32 %v397, %v412
        %v446 = vadd.f32 %v398, %v414
        %v447 = vadd.f32 %v399, %v416
        %v448 = vadd.f32 %v400, %v418
        %v449 = vadd.f32 %v401, %v420
        %v450 = vadd.f32 %v402, %v422
        %v451 = vadd.f32 %v403, %v424
        %v452 = vadd.f32 %v404, %v426
        %v453 = vadd.f32 %v405, %v428
        %v454 = vadd.f32 %v406, %v430
        %455 = vrot.lane.b32.xlu0 %v335, 125
        %v456 = vpop.permute.xlu0 %455
        %457 = vrot.lane.b32.xlu0 %v336, 125
        %v458 = vpop.permute.xlu0 %457
        %459 = vrot.lane.b32.xlu0 %v337, 125
        %v460 = vpop.permute.xlu0 %459
        %461 = vrot.lane.b32.xlu0 %v338, 125
        %v462 = vpop.permute.xlu0 %461
        %463 = vrot.lane.b32.xlu0 %v339, 125
        %v464 = vpop.permute.xlu0 %463
        %465 = vrot.lane.b32.xlu0 %v340, 125
        %v466 = vpop.permute.xlu0 %465
        %467 = vrot.lane.b32.xlu0 %v341, 125
        %v468 = vpop.permute.xlu0 %467
        %469 = vrot.lane.b32.xlu0 %v342, 125
        %v470 = vpop.permute.xlu0 %469
        %471 = vrot.lane.b32.xlu0 %v343, 125
        %v472 = vpop.permute.xlu0 %471
        %473 = vrot.lane.b32.xlu0 %v344, 125
        %v474 = vpop.permute.xlu0 %473
        %475 = vrot.lane.b32.xlu0 %v345, 125
        %v476 = vpop.permute.xlu0 %475
        %477 = vrot.lane.b32.xlu0 %v346, 125
        %v478 = vpop.permute.xlu0 %477
        %v491 = vadd.f32 %v443, %v456
        %v492 = vadd.f32 %v444, %v458
        %v493 = vadd.f32 %v445, %v460
        %v494 = vadd.f32 %v446, %v462
        %v495 = vadd.f32 %v447, %v464
        %v496 = vadd.f32 %v448, %v466
        %v497 = vadd.f32 %v449, %v468
        %v498 = vadd.f32 %v450, %v470
        %v499 = vadd.f32 %v451, %v472
        %v500 = vadd.f32 %v452, %v474
        %v501 = vadd.f32 %v453, %v476
        %v502 = vadd.f32 %v454, %v478
        %503 = vrot.lane.b32.xlu0 %v335, 124
        %v504 = vpop.permute.xlu0 %503
        %505 = vrot.lane.b32.xlu0 %v336, 124
        %v506 = vpop.permute.xlu0 %505
        %507 = vrot.lane.b32.xlu0 %v337, 124
        %v508 = vpop.permute.xlu0 %507
        %509 = vrot.lane.b32.xlu0 %v338, 124
        %v510 = vpop.permute.xlu0 %509
        %511 = vrot.lane.b32.xlu0 %v339, 124
        %v512 = vpop.permute.xlu0 %511
        %513 = vrot.lane.b32.xlu0 %v340, 124
        %v514 = vpop.permute.xlu0 %513
        %515 = vrot.lane.b32.xlu0 %v341, 124
        %v516 = vpop.permute.xlu0 %515
        %517 = vrot.lane.b32.xlu0 %v342, 124
        %v518 = vpop.permute.xlu0 %517
        %519 = vrot.lane.b32.xlu0 %v343, 124
        %v520 = vpop.permute.xlu0 %519
        %521 = vrot.lane.b32.xlu0 %v344, 124
        %v522 = vpop.permute.xlu0 %521
        %523 = vrot.lane.b32.xlu0 %v345, 124
        %v524 = vpop.permute.xlu0 %523
        %525 = vrot.lane.b32.xlu0 %v346, 124
        %v526 = vpop.permute.xlu0 %525
        %v539 = vadd.f32 %v491, %v504
        %v540 = vadd.f32 %v492, %v506
        %v541 = vadd.f32 %v493, %v508
        %v542 = vadd.f32 %v494, %v510
        %v543 = vadd.f32 %v495, %v512
        %v544 = vadd.f32 %v496, %v514
        %v545 = vadd.f32 %v497, %v516
        %v546 = vadd.f32 %v498, %v518
        %v547 = vadd.f32 %v499, %v520
        %v548 = vadd.f32 %v500, %v522
        %v549 = vadd.f32 %v501, %v524
        %v550 = vadd.f32 %v502, %v526
        %vm563 = vcmask 1046528
        %v564 = vrot.slane %v539, 1
        %v565 = vrot.slane %v540, 1
        %v566 = vsel %vm563, %v564, %v565
        %v567 = vrot.slane %v541, 1
        %v568 = vsel %vm563, %v565, %v567
        %v569 = vrot.slane %v542, 1
        %v570 = vrot.slane %v543, 1
        %v571 = vsel %vm563, %v569, %v570
        %v572 = vrot.slane %v544, 1
        %v573 = vsel %vm563, %v570, %v572
        %v574 = vrot.slane %v545, 1
        %v575 = vrot.slane %v546, 1
        %v576 = vsel %vm563, %v574, %v575
        %v577 = vrot.slane %v547, 1
        %v578 = vsel %vm563, %v575, %v577
        %v579 = vrot.slane %v548, 1
        %v580 = vrot.slane %v549, 1
        %v581 = vsel %vm563, %v579, %v580
        %v582 = vrot.slane %v550, 1
        %v583 = vsel %vm563, %v580, %v582
        %v592 = vadd.f32 %v539, %v566
        %v593 = vadd.f32 %v540, %v568
        %v594 = vadd.f32 %v542, %v571
        %v595 = vadd.f32 %v543, %v573
        %v596 = vadd.f32 %v545, %v576
        %v597 = vadd.f32 %v546, %v578
        %v598 = vadd.f32 %v548, %v581
        %v599 = vadd.f32 %v549, %v583
        %vm600 = vcmask 1045504
        %v601 = vrot.slane %v539, 2
        %v602 = vrot.slane %v540, 2
        %v603 = vsel %vm600, %v601, %v602
        %v604 = vrot.slane %v541, 2
        %v605 = vsel %vm600, %v602, %v604
        %v606 = vrot.slane %v542, 2
        %v607 = vrot.slane %v543, 2
        %v608 = vsel %vm600, %v606, %v607
        %v609 = vrot.slane %v544, 2
        %v610 = vsel %vm600, %v607, %v609
        %v611 = vrot.slane %v545, 2
        %v612 = vrot.slane %v546, 2
        %v613 = vsel %vm600, %v611, %v612
        %v614 = vrot.slane %v547, 2
        %v615 = vsel %vm600, %v612, %v614
        %v616 = vrot.slane %v548, 2
        %v617 = vrot.slane %v549, 2
        %v618 = vsel %vm600, %v616, %v617
        %v619 = vrot.slane %v550, 2
        %v620 = vsel %vm600, %v617, %v619
        %v629 = vadd.f32 %v592, %v603
        %v630 = vadd.f32 %v593, %v605
        %v631 = vadd.f32 %v594, %v608
        %v632 = vadd.f32 %v595, %v610
        %v633 = vadd.f32 %v596, %v613
        %v634 = vadd.f32 %v597, %v615
        %v635 = vadd.f32 %v598, %v618
        %v636 = vadd.f32 %v599, %v620
        %vm637 = vcmask 1044480
        %v638 = vrot.slane %v539, 3
        %v639 = vrot.slane %v540, 3
        %v640 = vsel %vm637, %v638, %v639
        %v641 = vrot.slane %v541, 3
        %v642 = vsel %vm637, %v639, %v641
        %v643 = vrot.slane %v542, 3
        %v644 = vrot.slane %v543, 3
        %v645 = vsel %vm637, %v643, %v644
        %v646 = vrot.slane %v544, 3
        %v647 = vsel %vm637, %v644, %v646
        %v648 = vrot.slane %v545, 3
        %v649 = vrot.slane %v546, 3
        %v650 = vsel %vm637, %v648, %v649
        %v651 = vrot.slane %v547, 3
        %v652 = vsel %vm637, %v649, %v651
        %v653 = vrot.slane %v548, 3
        %v654 = vrot.slane %v549, 3
        %v655 = vsel %vm637, %v653, %v654
        %v656 = vrot.slane %v550, 3
        %v657 = vsel %vm637, %v654, %v656
        %v666 = vadd.f32 %v629, %v640
        %v667 = vadd.f32 %v630, %v642
        %v668 = vadd.f32 %v631, %v645
        %v669 = vadd.f32 %v632, %v647
        %v670 = vadd.f32 %v633, %v650
        %v671 = vadd.f32 %v634, %v652
        %v672 = vadd.f32 %v635, %v655
        %v673 = vadd.f32 %v636, %v657
        %vm674 = vcmask 1043456
        %v675 = vrot.slane %v539, 4
        %v676 = vrot.slane %v540, 4
        %v677 = vsel %vm674, %v675, %v676
        %v678 = vrot.slane %v541, 4
        %v679 = vsel %vm674, %v676, %v678
        %v680 = vrot.slane %v542, 4
        %v681 = vrot.slane %v543, 4
        %v682 = vsel %vm674, %v680, %v681
        %v683 = vrot.slane %v544, 4
        %v684 = vsel %vm674, %v681, %v683
        %v685 = vrot.slane %v545, 4
        %v686 = vrot.slane %v546, 4
        %v687 = vsel %vm674, %v685, %v686
        %v688 = vrot.slane %v547, 4
        %v689 = vsel %vm674, %v686, %v688
        %v690 = vrot.slane %v548, 4
        %v691 = vrot.slane %v549, 4
        %v692 = vsel %vm674, %v690, %v691
        %v693 = vrot.slane %v550, 4
        %v694 = vsel %vm674, %v691, %v693
        %v703 = vadd.f32 %v666, %v677
        %v704 = vadd.f32 %v667, %v679
        %v705 = vadd.f32 %v668, %v682
        %v706 = vadd.f32 %v669, %v684
        %v707 = vadd.f32 %v670, %v687
        %v708 = vadd.f32 %v671, %v689
        %v709 = vadd.f32 %v672, %v692
        %v710 = vadd.f32 %v673, %v694
        %v711 = vlog2.pop %v703
        %v712 = vmul.f32 %v711, 0.6931472
        %v713 = vlog2.pop %v704
        %v714 = vmul.f32 %v713, 0.6931472
        %v715 = vlog2.pop %v705
        %v716 = vmul.f32 %v715, 0.6931472
        %v717 = vlog2.pop %v706
        %v718 = vmul.f32 %v717, 0.6931472
        %v719 = vlog2.pop %v707
        %v720 = vmul.f32 %v719, 0.6931472
        %v721 = vlog2.pop %v708
        %v722 = vmul.f32 %v721, 0.6931472
        %v723 = vlog2.pop %v709
        %v724 = vmul.f32 %v723, 0.6931472
        %v725 = vlog2.pop %v710
        %v726 = vmul.f32 %v725, 0.6931472
        %v727 = vmul.f32 %v712, 0.4
        %v728 = vmul.f32 %v714, 0.4
        %v729 = vmul.f32 %v716, 0.4
        %v730 = vmul.f32 %v718, 0.4
        %v731 = vmul.f32 %v720, 0.4
        %v732 = vmul.f32 %v722, 0.4
        %v733 = vmul.f32 %v724, 0.4
        %v734 = vmul.f32 %v726, 0.4
        %v735 = vmul.f32 %v727, 1.442695
        %v736 = vpow.pop %v735
        %v737 = vmul.f32 %v728, 1.442695
        %v738 = vpow.pop %v737
        %v739 = vmul.f32 %v729, 1.442695
        %v740 = vpow.pop %v739
        %v741 = vmul.f32 %v730, 1.442695
        %v742 = vpow.pop %v741
        %v743 = vmul.f32 %v731, 1.442695
        %v744 = vpow.pop %v743
        %v745 = vmul.f32 %v732, 1.442695
        %v746 = vpow.pop %v745
        %v747 = vmul.f32 %v733, 1.442695
        %v748 = vpow.pop %v747
        %v749 = vmul.f32 %v734, 1.442695
        %v750 = vpow.pop %v749
        %v751 = vld [vmem:[%s212] sm:$0xff]
        %v752 = vld [vmem:[%s212 + $0x8] sm:$0xff]
        %v753 = vld [vmem:[%s212 + $0x10] sm:$0xff]
        %v754 = vld [vmem:[%s212 + $0x18] sm:$0xff]
        %v755 = vld [vmem:[%s212 + $0x20] sm:$0xff]
        %v756 = vld [vmem:[%s212 + $0x28] sm:$0xff]
        %v757 = vld [vmem:[%s212 + $0x30] sm:$0xff]
        %v758 = vld [vmem:[%s212 + $0x38] sm:$0xff]
        %v759 = vmul.f32 %v736, 0.5
        %v760 = vmul.f32 %v738, 0.5
        %v761 = vmul.f32 %v740, 0.5
        %v762 = vmul.f32 %v742, 0.5
        %v763 = vmul.f32 %v744, 0.5
        %v764 = vmul.f32 %v746, 0.5
        %v765 = vmul.f32 %v748, 0.5
        %v766 = vmul.f32 %v750, 0.5
        %v767 = vmul.f32 %v751, 0.5
        %v768 = vmul.f32 %v752, 0.5
        %v769 = vmul.f32 %v753, 0.5
        %v770 = vmul.f32 %v754, 0.5
        %v771 = vmul.f32 %v755, 0.5
        %v772 = vmul.f32 %v756, 0.5
        %v773 = vmul.f32 %v757, 0.5
        %v774 = vmul.f32 %v758, 0.5
        %v775 = vadd.f32 %v759, %v767
        %v776 = vadd.f32 %v760, %v768
        %v777 = vadd.f32 %v761, %v769
        %v778 = vadd.f32 %v762, %v770
        %v779 = vadd.f32 %v763, %v771
        %v780 = vadd.f32 %v764, %v772
        %v781 = vadd.f32 %v765, %v773
        %v782 = vadd.f32 %v766, %v774
        %vm783 = vcmask 130048
        %784 = vst.msk [vmem:[%s191] sm:$0xff] %vm783, %v775
        %785 = vst.msk [vmem:[%s191 + $0x8] sm:$0xff] %vm783, %v776
        %786 = vst.msk [vmem:[%s191 + $0x10] sm:$0xff] %vm783, %v777
        %787 = vst.msk [vmem:[%s191 + $0x18] sm:$0xff] %vm783, %v778
        %788 = vst.msk [vmem:[%s191 + $0x20] sm:$0xff] %vm783, %v779
        %789 = vst.msk [vmem:[%s191 + $0x28] sm:$0xff] %vm783, %v780
        %790 = vst.msk [vmem:[%s191 + $0x30] sm:$0xff] %vm783, %v781
        %791 = vst.msk [vmem:[%s191 + $0x38] sm:$0xff] %vm783, %v782
        %s792 = sand.u32 %s94, 1
        %s793 = scalar_lea.sflag [#allocation3], %s792
        %s794 = sand.u32 %s94, 1
        %s795 = smul.addr %s794, 64
        %s796 = scalar_lea.vmem [#allocation2], %s795
        // Predicated region
        $region29: #{tpu_custom_call.1} parent=27 // pred_check
          %p797 = pneg %p104
        $region30: #{tpu_custom_call.1} parent=27 // pred_check_branch
          %799 = sbr.rel (%p797) target = $region32
        $region31: #{tpu_custom_call.1} parent=27 // pred_region
          %s800 = smul.u32 4, %s21
          %s802 = ssub.s32 1024, 1024
          %803 = vsyncadd %s793, %s802
          %s804 = smul.addr %s800, 2
          %s805 = smul.addr %s20, 8
          %s806 = sadd.s32 %s804, %s805
          %s807 = smul.addr %s806, 128
          %s808 = scalar_lea.hbm %s2, %s807
          %s809 = sshll.u32 %s796, 4
          %s810 = int_to_ptr.vmem [resolvable:$true] %s809
          %815 = dma.vmem_to_hbm [thread:$0]  %s810, 1024, %s808, %s793, 128, 128, 8
        $region32: #{tpu_custom_call.1} parent=27 // pred_fallthru
          _
      $region28: #{tpu_custom_call.1} parent=5 // pred_fallthru
        _
      %p816 = scmp.le.s32.totalorder 2, %s11
      // Predicated region
      $region33: #{tpu_custom_call.1} parent=5 // pred_check
        %p817 = pneg %p816
      $region34: #{tpu_custom_call.1} parent=5 // pred_check_branch
        %819 = sbr.rel (%p817) target = $region36
      $region35: #{tpu_custom_call.1} parent=5 // pred_region
        %s820 = ssub.s32 %s11, 2
        // Predicated region
        $region37: #{tpu_custom_call.1} parent=35 // pred_check
          %p821 = pneg %p110
        $region38: #{tpu_custom_call.1} parent=35 // pred_check_branch
          %823 = sbr.rel (%p821) target = $region40
        $region39: #{tpu_custom_call.1} parent=35 // pred_region
          %s824 = sand.u32 %s95, 1
          %s825 = scalar_lea.sflag [#allocation3], %s824
          %s826 = sand.u32 %s95, 1
          %s827 = smul.addr %s826, 64
          %s828 = scalar_lea.vmem [#allocation2], %s827
          %829 = dma.done %s825, 1024
        $region40: #{tpu_custom_call.1} parent=35 // pred_fallthru
          _
      $region36: #{tpu_custom_call.1} parent=5 // pred_fallthru
        _
    $region6: #{tpu_custom_call.1} parent=1 // loop_footer
      %s15 = sadd.s32 1, %s11
    $region7: #{tpu_custom_call.1} parent=1 // loop_footer_branch
      %10 = sbr.rel target = $region3
    $region8: #{tpu_custom_call.1} parent=1 // loop_exit
      _
    %830 = vsyncpa [#allocation3], 1
    %s831 = scalar_lea.sflag [#allocation3], 1
    %832 = vsyncpa %s831, 1

</llo_original>
